<compile_context>
chip_gen: v5e
topology: v5e:2x2
jax: 0.10.0
libtpu: 0.0.40
codegen_flags: <defaults>
</compile_context>

<pallas_src>
import jax
import jax.numpy as jnp
import numpy as np
from jax.experimental import pallas as pl
from jax.experimental.pallas import tpu as pltpu

# ---------------- model sizes (synthetic, deterministic init) ----------------
B = 2                                    # batch
C_IN = 4                                 # image channels
H = W = 16                               # image spatial
K_FEAT = 6                               # feature-extractor output channels (k)
KSIZE, STRIDE, PAD = 3, 4, 1
D = (H + 2 * PAD - KSIZE) // STRIDE + 1  # d = 4
D2 = D * D                               # d^2 = 16 objects
D4 = D2 * D2                             # d^4 = 256 pairs per batch element
K2 = K_FEAT + 2                          # k + 2 coordinate channels
Q_DIM = 11                               # question dim (from `k*2 + 11`)
G_IN = 2 * K2 + Q_DIM                    # g input dim = 27
HG = 32                                  # g hidden / output dim
HF = 32                                  # f hidden dim
OUT = 10                                 # f output dim
CKK = C_IN * KSIZE * KSIZE               # 36 (im2col patch length)

# ----------------- packed-parameter layout (static lane offsets) -------------
OFF_W1L = 0                              # w1[:K2].T        (HG, K2)
OFF_W1R = K2                             # w1[K2:2K2].T     (HG, K2)
OFF_W1Q = 2 * K2                         # w1[2K2:].T       (HG, Q_DIM)
OFF_B1 = OFF_W1Q + Q_DIM                 # b1.T             (HG, 1)
OFF_W2 = OFF_B1 + 1                      # w2.T             (HG, HG)
OFF_B2 = OFF_W2 + HG                     # b2.T             (HG, 1)
OFF_WF1 = OFF_B2 + 1                     # wf1              (HG, HF)
OFF_WF2 = OFF_WF1 + HF                   # wf2              (HF, OUT)
W32_COLS = OFF_WF2 + OUT                 # 103

MISC_COORD = CKK + 1                     # coords start column in MISCPACK
MISC_COLS = MISC_COORD + B * D2          # 69
ROW_BF1 = K_FEAT                         # row 6 holds bf1 (1, HF)
ROW_BF2 = K_FEAT + 1                     # row 7 holds bf2 (1, OUT)
MISC_ROWS = 8


# ------------------------- host-side constants --------------------------------
def _build_selpack():
    """Batch-shared pair selector: rows 0:D2 pick the LEFT object (q % d^2),
    rows D2:2*D2 pick the RIGHT object (q // d^2).  (2*d^2, d^4) = (32, 256)."""
    q = np.arange(D4)
    sel = np.zeros((2 * D2, D4), np.float32)
    sel[q % D2, q] = 1.0
    sel[D2 + q // D2, q] = 1.0
    return jnp.asarray(sel)


def _coords():
    """torch.arange(0, 1+1e-5, 1/(d-1)) == arange(d)/(d-1); row0=coord_x(j),
    row1=coord_y(i); tiled per batch element -> (2, B*d^2)."""
    c = np.arange(D, dtype=np.float32) / (D - 1)
    cx = np.tile(c, D)
    cy = np.repeat(c, D)
    return np.tile(np.stack([cx, cy], axis=0), (1, B))


SELPACK = _build_selpack()


def pack_params(p):
    """One-time host-side packing of every weight / bias into two buffers
    (runs OUTSIDE the per-call jit path; params are static)."""
    w1 = np.asarray(p["w1"], np.float32)
    w32 = np.zeros((HG, W32_COLS), np.float32)
    w32[:, OFF_W1L:OFF_W1L + K2] = w1[:K2].T
    w32[:, OFF_W1R:OFF_W1R + K2] = w1[K2:2 * K2].T
    w32[:, OFF_W1Q:OFF_W1Q + Q_DIM] = w1[2 * K2:].T
    w32[:, OFF_B1:OFF_B1 + 1] = np.asarray(p["b1"], np.float32).T
    w32[:, OFF_W2:OFF_W2 + HG] = np.asarray(p["w2"], np.float32).T
    w32[:, OFF_B2:OFF_B2 + 1] = np.asarray(p["b2"], np.float32).T
    w32[:, OFF_WF1:OFF_WF1 + HF] = np.asarray(p["wf1"], np.float32)
    w32[:, OFF_WF2:OFF_WF2 + OUT] = np.asarray(p["wf2"], np.float32)

    misc = np.zeros((MISC_ROWS, MISC_COLS), np.float32)
    misc[0:K_FEAT, 0:CKK] = np.asarray(p["wc"], np.float32).T
    misc[0:K_FEAT, CKK:CKK + 1] = np.asarray(p["bc"], np.float32).T
    misc[0:2, MISC_COORD:MISC_COORD + B * D2] = _coords()
    misc[ROW_BF1, 0:HF] = np.asarray(p["bf1"], np.float32)[0]
    misc[ROW_BF2, 0:OUT] = np.asarray(p["bf2"], np.float32)[0]
    return jnp.asarray(w32), jnp.asarray(misc)


# ------------------------------ the fused kernel ------------------------------
def rn_fused_kernel(patchesT_ref, qT_ref, w32_ref, misc_ref, sel_ref, o_ref):
    f32 = jnp.float32
    dot = lambda a, b: jnp.dot(a, b, preferred_element_type=f32)

    # --- unpack parameters: static slices of the two packed VMEM buffers ---
    wcT = misc_ref[0:K_FEAT, 0:CKK]                            # (6, 36)
    bcT = misc_ref[0:K_FEAT, CKK:CKK + 1]                      # (6, 1)
    coordsT = misc_ref[0:2, MISC_COORD:MISC_COORD + B * D2]    # (2, B*D2)
    bf1 = misc_ref[ROW_BF1:ROW_BF1 + 1, 0:HF]                  # (1, HF)
    bf2 = misc_ref[ROW_BF2:ROW_BF2 + 1, 0:OUT]                 # (1, OUT)

    w1lT = w32_ref[:, OFF_W1L:OFF_W1L + K2]                    # (HG, K2)
    w1rT = w32_ref[:, OFF_W1R:OFF_W1R + K2]                    # (HG, K2)
    w1qT = w32_ref[:, OFF_W1Q:OFF_W1Q + Q_DIM]                 # (HG, Q_DIM)
    b1T = w32_ref[:, OFF_B1:OFF_B1 + 1]                        # (HG, 1)
    w2T = w32_ref[:, OFF_W2:OFF_W2 + HG]                       # (HG, HG)
    b2T = w32_ref[:, OFF_B2:OFF_B2 + 1]                        # (HG, 1)
    wf1 = w32_ref[:, OFF_WF1:OFF_WF1 + HF]                     # (HG, HF)
    wf2 = w32_ref[:, OFF_WF2:OFF_WF2 + OUT]                    # (HF, OUT)

    # --- feature extractor: conv-as-matmul + ReLU, objects on lanes ---
    featT = jnp.maximum(dot(wcT, patchesT_ref[...]) + bcT, 0.0)   # (K_FEAT, B*D2)
    xT = jnp.concatenate([featT, coordsT], axis=0)                # (K2, B*D2)

    # --- g layer 1, split by linearity into left / right / question parts ---
    xlT = dot(w1lT, xT)                                        # (HG, B*D2)
    xrT = dot(w1rT, xT)                                        # (HG, B*D2)
    qbT = dot(w1qT, qT_ref[...]) + b1T                         # (HG, B)

    # --- per-batch relation core (static B-loop, everything lane-dense) ---
    s_cols = []
    for b in range(B):
        lr = jnp.concatenate(
            [xlT[:, b * D2:(b + 1) * D2], xrT[:, b * D2:(b + 1) * D2]],
            axis=1)                                            # (HG, 2*D2)
        # all d^4 pair pre-activations with ONE 0/1 selection matmul (MXU),
        # question/bias contribution broadcast over the pair lanes.
        h1 = jnp.maximum(dot(lr, sel_ref[...]) + qbT[:, b:b + 1], 0.0)  # (HG, D4)
        h2 = jnp.maximum(dot(w2T, h1) + b2T, 0.0)                       # (HG, D4)
        s_cols.append(jnp.sum(h2, axis=1, keepdims=True))               # (HG, 1)

    # --- pair-sum columns -> (B, HG) rows via one ALIGNED (32,128) transpose ---
    sT = jnp.concatenate(
        s_cols + [jnp.zeros((HG, 128 - B), f32)], axis=1)      # (HG, 128)
    s = sT.T[0:B, :]                                           # (B, HG)

    # --- f MLP un-transposed, so the output lands directly as (B, OUT) ---
    f1 = jnp.maximum(dot(s, wf1) + bf1, 0.0)                   # (B, HF)
    o_ref[...] = dot(f1, wf2) + bf2                            # (B, OUT)


# -------------------------------- JAX glue -----------------------------------
def make_patchesT(img):
    """NCHW image -> (C*K*K, B*d^2) im2col patches for a 3x3 stride-4 pad-1 conv."""
    # TODO(synk): the strided 3x3/stride-4 patch gather stays as wrapper-side
    # XLA glue; it has no clean single-Pallas expression at this layout.
    x = jnp.pad(img, ((0, 0), (0, 0), (PAD, PAD), (PAD, PAD)))
    cols = [x[:, :, ki:ki + STRIDE * D:STRIDE, kj:kj + STRIDE * D:STRIDE]
            for ki in range(KSIZE) for kj in range(KSIZE)]     # each (B, C, D, D)
    cols = jnp.stack(cols, axis=2)                             # (B, C, 9, D, D)
    return cols.transpose(1, 2, 0, 3, 4).reshape(CKK, B * D2)  # (C*9, B*D2)


_COST = pl.CostEstimate(flops=2_200_000, transcendentals=0, bytes_accessed=53_000)


def rn_pallas(patchesT, qT, w32, misc):
    vmem = pl.BlockSpec(memory_space=pltpu.MemorySpace.VMEM)
    return pl.pallas_call(
        rn_fused_kernel,
        out_shape=jax.ShapeDtypeStruct((B, OUT), jnp.float32),
        in_specs=[vmem] * 5,
        out_specs=vmem,
        cost_estimate=_COST,
    )(patchesT, qT, w32, misc, SELPACK)


@jax.jit
def rn_forward(image, question, w32, misc):
    patchesT = make_patchesT(image)                            # (36, B*D2)
    return rn_pallas(patchesT, question.T, w32, misc)          # (B, OUT)


# ---------------------------- reference (pure JAX) ----------------------------
def rn_reference(image, question, p):
    patches = make_patchesT(image).T                           # (B*D2, CKK)
    feat = jnp.maximum(patches @ p["wc"] + p["bc"], 0.0).reshape(B, D2, K_FEAT)
    coord = jnp.arange(D, dtype=jnp.float32) / (D - 1)
    cx = jnp.broadcast_to(jnp.tile(coord, D)[None, :, None], (B, D2, 1))
    cy = jnp.broadcast_to(jnp.repeat(coord, D)[None, :, None], (B, D2, 1))
    x = jnp.concatenate([feat, cx, cy], axis=2)                # (B, D2, K2)
    x_left = jnp.broadcast_to(x[:, None, :, :], (B, D2, D2, K2)).reshape(B, D4, K2)
    x_right = jnp.broadcast_to(x[:, :, None, :], (B, D2, D2, K2)).reshape(B, D4, K2)
    qrep = jnp.broadcast_to(question[:, None, :], (B, D4, Q_DIM))
    pairs = jnp.concatenate([x_left, x_right, qrep], axis=2).reshape(B * D4, G_IN)
    g1 = jnp.maximum(pairs @ p["w1"] + p["b1"], 0.0)
    g2 = jnp.maximum(g1 @ p["w2"] + p["b2"], 0.0)
    s = g2.reshape(B, D4, HG).sum(axis=1)
    f1 = jnp.maximum(s @ p["wf1"] + p["bf1"], 0.0)
    return f1 @ p["wf2"] + p["bf2"]


# -------------------------------- parameters ----------------------------------
def init_params(key):
    ks = jax.random.split(key, 10)
    p = {}
    p["wc"] = jax.random.normal(ks[0], (CKK, K_FEAT), jnp.float32) * 0.1
    p["bc"] = jax.random.normal(ks[1], (1, K_FEAT), jnp.float32) * 0.1
    p["w1"] = jax.random.normal(ks[2], (G_IN, HG), jnp.float32) * 0.1
    p["b1"] = jax.random.normal(ks[3], (1, HG), jnp.float32) * 0.1
    p["w2"] = jax.random.normal(ks[4], (HG, HG), jnp.float32) * 0.1
    p["b2"] = jax.random.normal(ks[5], (1, HG), jnp.float32) * 0.1
    p["wf1"] = jax.random.normal(ks[6], (HG, HF), jnp.float32) * 0.1
    p["bf1"] = jax.random.normal(ks[7], (1, HF), jnp.float32) * 0.1
    p["wf2"] = jax.random.normal(ks[8], (HF, OUT), jnp.float32) * 0.1
    p["bf2"] = jax.random.normal(ks[9], (1, OUT), jnp.float32) * 0.1
    return p


if __name__ == "__main__":
    key = jax.random.PRNGKey(0)
    k_img, k_q, k_param = jax.random.split(key, 3)
    image = jax.random.normal(k_img, (B, C_IN, H, W), jnp.float32)
    question = jax.random.normal(k_q, (B, Q_DIM), jnp.float32)
    params = init_params(k_param)

    # one-time host-side parameter packing (outside the per-call jit path)
    w32, misc = pack_params(params)

    out = rn_forward(image, question, w32, misc)
    out = jax.block_until_ready(out)
    assert out.shape == (B, OUT)

    ref = rn_reference(image, question, params)
    np.testing.assert_allclose(np.asarray(out), np.asarray(ref), rtol=1e-4, atol=1e-4)
    print("KERNEL_OK")
</pallas_src>

<mosaic_0001>
module attributes {stable_mosaic.version = 11 : i64} {
  func.func @rn_fused_kernel(%arg0: memref<36x32xf32, #tpu.memory_space<vmem>>, %arg1: memref<11x2xf32, #tpu.memory_space<vmem>>, %arg2: memref<32x103xf32, #tpu.memory_space<vmem>>, %arg3: memref<8x69xf32, #tpu.memory_space<vmem>>, %arg4: memref<32x256xf32, #tpu.memory_space<vmem>>, %arg5: memref<2x10xf32, #tpu.memory_space<vmem>>) attributes {dimension_semantics = [], scalar_prefetch = 0 : i64, scratch_operands = 0 : i64, tpu.core_type = #tpu.core_type<tc>} {
    %c0 = arith.constant 0 : index
    %c0_0 = arith.constant 0 : index
    %0 = vector.load %arg3[%c0, %c0_0] : memref<8x69xf32, #tpu.memory_space<vmem>>, vector<6x36xf32>
    %c0_1 = arith.constant 0 : index
    %c36 = arith.constant 36 : index
    %1 = vector.load %arg3[%c0_1, %c36] : memref<8x69xf32, #tpu.memory_space<vmem>>, vector<6x1xf32>
    %c0_2 = arith.constant 0 : index
    %c37 = arith.constant 37 : index
    %2 = vector.load %arg3[%c0_2, %c37] : memref<8x69xf32, #tpu.memory_space<vmem>>, vector<2x32xf32>
    %c6 = arith.constant 6 : index
    %c0_3 = arith.constant 0 : index
    %3 = vector.load %arg3[%c6, %c0_3] : memref<8x69xf32, #tpu.memory_space<vmem>>, vector<1x32xf32>
    %c7 = arith.constant 7 : index
    %c0_4 = arith.constant 0 : index
    %4 = vector.load %arg3[%c7, %c0_4] : memref<8x69xf32, #tpu.memory_space<vmem>>, vector<1x10xf32>
    %c0_5 = arith.constant 0 : index
    %c0_6 = arith.constant 0 : index
    %5 = vector.load %arg2[%c0_5, %c0_6] : memref<32x103xf32, #tpu.memory_space<vmem>>, vector<32x8xf32>
    %c0_7 = arith.constant 0 : index
    %c8 = arith.constant 8 : index
    %6 = vector.load %arg2[%c0_7, %c8] : memref<32x103xf32, #tpu.memory_space<vmem>>, vector<32x8xf32>
    %c0_8 = arith.constant 0 : index
    %c16 = arith.constant 16 : index
    %7 = vector.load %arg2[%c0_8, %c16] : memref<32x103xf32, #tpu.memory_space<vmem>>, vector<32x11xf32>
    %c0_9 = arith.constant 0 : index
    %c27 = arith.constant 27 : index
    %8 = vector.load %arg2[%c0_9, %c27] : memref<32x103xf32, #tpu.memory_space<vmem>>, vector<32x1xf32>
    %c0_10 = arith.constant 0 : index
    %c28 = arith.constant 28 : index
    %9 = vector.load %arg2[%c0_10, %c28] : memref<32x103xf32, #tpu.memory_space<vmem>>, vector<32x32xf32>
    %c0_11 = arith.constant 0 : index
    %c60 = arith.constant 60 : index
    %10 = vector.load %arg2[%c0_11, %c60] : memref<32x103xf32, #tpu.memory_space<vmem>>, vector<32x1xf32>
    %c0_12 = arith.constant 0 : index
    %c61 = arith.constant 61 : index
    %11 = vector.load %arg2[%c0_12, %c61] : memref<32x103xf32, #tpu.memory_space<vmem>>, vector<32x32xf32>
    %c0_13 = arith.constant 0 : index
    %c93 = arith.constant 93 : index
    %12 = vector.load %arg2[%c0_13, %c93] : memref<32x103xf32, #tpu.memory_space<vmem>>, vector<32x10xf32>
    %c0_14 = arith.constant 0 : index
    %c0_15 = arith.constant 0 : index
    %13 = vector.load %arg0[%c0_14, %c0_15] : memref<36x32xf32, #tpu.memory_space<vmem>>, vector<36x32xf32>
    %cst = arith.constant dense<0.000000e+00> : vector<6x32xf32>
    %14 = tpu.matmul %0, %13, %cst {dimension_numbers = #tpu.dot_dimension_numbers<[1], [0], [0], [1], [0, 0, 1, 1], [], []>} : vector<6x36xf32>, vector<36x32xf32>, vector<6x32xf32> -> vector<6x32xf32>
    %15 = vector.broadcast %1 : vector<6x1xf32> to vector<6x32xf32>
    %16 = arith.addf %14, %15 : vector<6x32xf32>
    %cst_16 = arith.constant 0.000000e+00 : f32
    %17 = vector.broadcast %cst_16 : f32 to vector<6x32xf32>
    %18 = arith.maximumf %16, %17 : vector<6x32xf32>
    %19 = tpu.concatenate %18, %2 in 0 : vector<6x32xf32>, vector<2x32xf32> -> vector<8x32xf32>
    %cst_17 = arith.constant dense<0.000000e+00> : vector<32x32xf32>
    %20 = tpu.matmul %5, %19, %cst_17 {dimension_numbers = #tpu.dot_dimension_numbers<[1], [0], [0], [1], [0, 0, 1, 1], [], []>} : vector<32x8xf32>, vector<8x32xf32>, vector<32x32xf32> -> vector<32x32xf32>
    %cst_18 = arith.constant dense<0.000000e+00> : vector<32x32xf32>
    %21 = tpu.matmul %6, %19, %cst_18 {dimension_numbers = #tpu.dot_dimension_numbers<[1], [0], [0], [1], [0, 0, 1, 1], [], []>} : vector<32x8xf32>, vector<8x32xf32>, vector<32x32xf32> -> vector<32x32xf32>
    %c0_19 = arith.constant 0 : index
    %c0_20 = arith.constant 0 : index
    %22 = vector.load %arg1[%c0_19, %c0_20] : memref<11x2xf32, #tpu.memory_space<vmem>>, vector<11x2xf32>
    %cst_21 = arith.constant dense<0.000000e+00> : vector<32x2xf32>
    %23 = tpu.matmul %7, %22, %cst_21 {dimension_numbers = #tpu.dot_dimension_numbers<[1], [0], [0], [1], [0, 0, 1, 1], [], []>} : vector<32x11xf32>, vector<11x2xf32>, vector<32x2xf32> -> vector<32x2xf32>
    %24 = vector.broadcast %8 : vector<32x1xf32> to vector<32x2xf32>
    %25 = arith.addf %23, %24 : vector<32x2xf32>
    %26 = vector.extract_strided_slice %20 {offsets = [0, 0], sizes = [32, 16], strides = [1, 1]} : vector<32x32xf32> to vector<32x16xf32>
    %27 = vector.extract_strided_slice %21 {offsets = [0, 0], sizes = [32, 16], strides = [1, 1]} : vector<32x32xf32> to vector<32x16xf32>
    %28 = tpu.concatenate %26, %27 in 1 : vector<32x16xf32>, vector<32x16xf32> -> vector<32x32xf32>
    %c0_22 = arith.constant 0 : index
    %c0_23 = arith.constant 0 : index
    %29 = vector.load %arg4[%c0_22, %c0_23] : memref<32x256xf32, #tpu.memory_space<vmem>>, vector<32x256xf32>
    %cst_24 = arith.constant dense<0.000000e+00> : vector<32x256xf32>
    %30 = tpu.matmul %28, %29, %cst_24 {dimension_numbers = #tpu.dot_dimension_numbers<[1], [0], [0], [1], [0, 0, 1, 1], [], []>} : vector<32x32xf32>, vector<32x256xf32>, vector<32x256xf32> -> vector<32x256xf32>
    %31 = vector.extract_strided_slice %25 {offsets = [0, 0], sizes = [32, 1], strides = [1, 1]} : vector<32x2xf32> to vector<32x1xf32>
    %32 = vector.broadcast %31 : vector<32x1xf32> to vector<32x256xf32>
    %33 = arith.addf %30, %32 : vector<32x256xf32>
    %cst_25 = arith.constant 0.000000e+00 : f32
    %34 = vector.broadcast %cst_25 : f32 to vector<32x256xf32>
    %35 = arith.maximumf %33, %34 : vector<32x256xf32>
    %cst_26 = arith.constant dense<0.000000e+00> : vector<32x256xf32>
    %36 = tpu.matmul %9, %35, %cst_26 {dimension_numbers = #tpu.dot_dimension_numbers<[1], [0], [0], [1], [0, 0, 1, 1], [], []>} : vector<32x32xf32>, vector<32x256xf32>, vector<32x256xf32> -> vector<32x256xf32>
    %37 = vector.broadcast %10 : vector<32x1xf32> to vector<32x256xf32>
    %38 = arith.addf %36, %37 : vector<32x256xf32>
    %cst_27 = arith.constant 0.000000e+00 : f32
    %39 = vector.broadcast %cst_27 : f32 to vector<32x256xf32>
    %40 = arith.maximumf %38, %39 : vector<32x256xf32>
    %cst_28 = arith.constant dense<0.000000e+00> : vector<32xf32>
    %41 = vector.multi_reduction <add>, %40, %cst_28 [1] : vector<32x256xf32> to vector<32xf32>
    %42 = vector.shape_cast %41 : vector<32xf32> to vector<32x1xf32>
    %43 = vector.extract_strided_slice %20 {offsets = [0, 16], sizes = [32, 16], strides = [1, 1]} : vector<32x32xf32> to vector<32x16xf32>
    %44 = vector.extract_strided_slice %21 {offsets = [0, 16], sizes = [32, 16], strides = [1, 1]} : vector<32x32xf32> to vector<32x16xf32>
    %45 = tpu.concatenate %43, %44 in 1 : vector<32x16xf32>, vector<32x16xf32> -> vector<32x32xf32>
    %c0_29 = arith.constant 0 : index
    %c0_30 = arith.constant 0 : index
    %46 = vector.load %arg4[%c0_29, %c0_30] : memref<32x256xf32, #tpu.memory_space<vmem>>, vector<32x256xf32>
    %cst_31 = arith.constant dense<0.000000e+00> : vector<32x256xf32>
    %47 = tpu.matmul %45, %46, %cst_31 {dimension_numbers = #tpu.dot_dimension_numbers<[1], [0], [0], [1], [0, 0, 1, 1], [], []>} : vector<32x32xf32>, vector<32x256xf32>, vector<32x256xf32> -> vector<32x256xf32>
    %48 = vector.extract_strided_slice %25 {offsets = [0, 1], sizes = [32, 1], strides = [1, 1]} : vector<32x2xf32> to vector<32x1xf32>
    %49 = vector.broadcast %48 : vector<32x1xf32> to vector<32x256xf32>
    %50 = arith.addf %47, %49 : vector<32x256xf32>
    %cst_32 = arith.constant 0.000000e+00 : f32
    %51 = vector.broadcast %cst_32 : f32 to vector<32x256xf32>
    %52 = arith.maximumf %50, %51 : vector<32x256xf32>
    %cst_33 = arith.constant dense<0.000000e+00> : vector<32x256xf32>
    %53 = tpu.matmul %9, %52, %cst_33 {dimension_numbers = #tpu.dot_dimension_numbers<[1], [0], [0], [1], [0, 0, 1, 1], [], []>} : vector<32x32xf32>, vector<32x256xf32>, vector<32x256xf32> -> vector<32x256xf32>
    %54 = vector.broadcast %10 : vector<32x1xf32> to vector<32x256xf32>
    %55 = arith.addf %53, %54 : vector<32x256xf32>
    %cst_34 = arith.constant 0.000000e+00 : f32
    %56 = vector.broadcast %cst_34 : f32 to vector<32x256xf32>
    %57 = arith.maximumf %55, %56 : vector<32x256xf32>
    %cst_35 = arith.constant dense<0.000000e+00> : vector<32xf32>
    %58 = vector.multi_reduction <add>, %57, %cst_35 [1] : vector<32x256xf32> to vector<32xf32>
    %59 = vector.shape_cast %58 : vector<32xf32> to vector<32x1xf32>
    %cst_36 = arith.constant 0.000000e+00 : f32
    %60 = vector.broadcast %cst_36 : f32 to vector<32x126xf32>
    %61 = tpu.concatenate %42, %59, %60 in 1 : vector<32x1xf32>, vector<32x1xf32>, vector<32x126xf32> -> vector<32x128xf32>
    %62 = tpu.transpose %61, [1, 0] : vector<32x128xf32> -> vector<128x32xf32>
    %63 = vector.extract_strided_slice %62 {offsets = [0, 0], sizes = [2, 32], strides = [1, 1]} : vector<128x32xf32> to vector<2x32xf32>
    %cst_37 = arith.constant dense<0.000000e+00> : vector<2x32xf32>
    %64 = tpu.matmul %63, %11, %cst_37 {dimension_numbers = #tpu.dot_dimension_numbers<[1], [0], [0], [1], [0, 0, 1, 1], [], []>} : vector<2x32xf32>, vector<32x32xf32>, vector<2x32xf32> -> vector<2x32xf32>
    %65 = vector.broadcast %3 : vector<1x32xf32> to vector<2x32xf32>
    %66 = arith.addf %64, %65 : vector<2x32xf32>
    %cst_38 = arith.constant 0.000000e+00 : f32
    %67 = vector.broadcast %cst_38 : f32 to vector<2x32xf32>
    %68 = arith.maximumf %66, %67 : vector<2x32xf32>
    %cst_39 = arith.constant dense<0.000000e+00> : vector<2x10xf32>
    %69 = tpu.matmul %68, %12, %cst_39 {dimension_numbers = #tpu.dot_dimension_numbers<[1], [0], [0], [1], [0, 0, 1, 1], [], []>} : vector<2x32xf32>, vector<32x10xf32>, vector<2x10xf32> -> vector<2x10xf32>
    %70 = vector.broadcast %4 : vector<1x10xf32> to vector<2x10xf32>
    %71 = arith.addf %69, %70 : vector<2x10xf32>
    %c0_40 = arith.constant 0 : index
    %c0_41 = arith.constant 0 : index
    %72 = vector.load %arg5[%c0_40, %c0_41] : memref<2x10xf32, #tpu.memory_space<vmem>>, vector<2x10xf32>
    tpu.vector_store %arg5[%c0_40, %c0_41], %71 {strides = array<i32>} : memref<2x10xf32, #tpu.memory_space<vmem>>, vector<2x10xf32>,
    return
  }
}

</mosaic_0001>

<llo_original>
// kernel: rn_forward.1
$region0: #{rn_forward.1}
  #allocation0 [shape = 'u32[]', space=smem, size = 0x4, offset = 0x4, fixed_abs, tag = 'smem constant byte address 0x4 - core index']
  #allocation1 [shape = 'u32[72,128]{1,0:T(1,128)}', space=vmem, size = 0x9000, scoped, tag = 'internal scratch']
  %s0 = inlined_call_operand.vmem [shape: f32[36,32], index: 0, kind: input, shape index: {}]
  %s1 = inlined_call_operand.vmem [shape: f32[11,2], index: 1, kind: input, shape index: {}]
  %s2 = inlined_call_operand.vmem [shape: f32[32,103], index: 2, kind: input, shape index: {}]
  %s3 = inlined_call_operand.vmem [shape: f32[8,69], index: 3, kind: input, shape index: {}]
  %s4 = inlined_call_operand.vmem [shape: f32[32,256], index: 4, kind: input, shape index: {}]
  %s5 = inlined_call_operand.hbm [shape: f32[2,10], index: 5, kind: output, shape index: {}]
  %s6 = sld [smem:[#allocation0]]
  $region30: #{rn_forward.1} parent=0
    _
  %s8 = ssub.s32 1, %s6
  %s9 = scalar_select 0, %s8, %s6
  $region1: #{rn_forward.1} parent=0
    #allocation2 [shape = 'u8[1024]{0}', space=vmem, size = 0x400, scoped, tag = 'output window, operand 0, single buffered']
    #allocation3 [shape = 's32[1]{0}', space=sflag, size = 0x4, scoped, tag = 'scoped memory for rn_forward.1']
    %10 = vsyncpa [#allocation3], 0
    // Predicated region
    $region2: #{rn_forward.1} parent=1 // pred_check
      _
    $region3: #{rn_forward.1} parent=1 // pred_check_branch
      %12 = sbr.rel (0) target = $region5
    $region4: #{rn_forward.1} parent=1 // pred_region
      _
    $region5: #{rn_forward.1} parent=1 // pred_fallthru
      _
    // Predicated region
    $region6: #{rn_forward.1} parent=1 // pred_check
      _
    $region7: #{rn_forward.1} parent=1 // pred_check_branch
      %14 = sbr.rel (0) target = $region9
    $region8: #{rn_forward.1} parent=1 // pred_region
      _
    $region9: #{rn_forward.1} parent=1 // pred_fallthru
      _
    // Predicated region
    $region10: #{rn_forward.1} parent=1 // pred_check
      _
    $region11: #{rn_forward.1} parent=1 // pred_check_branch
      %16 = sbr.rel (0) target = $region13
    $region12: #{rn_forward.1} parent=1 // pred_region
      _
    $region13: #{rn_forward.1} parent=1 // pred_fallthru
      _
    // Predicated region
    $region14: #{rn_forward.1} parent=1 // pred_check
      _
    $region15: #{rn_forward.1} parent=1 // pred_check_branch
      %18 = sbr.rel (0) target = $region17
    $region16: #{rn_forward.1} parent=1 // pred_region
      _
    $region17: #{rn_forward.1} parent=1 // pred_fallthru
      _
    // Predicated region
    $region18: #{rn_forward.1} parent=1 // pred_check
      _
    $region19: #{rn_forward.1} parent=1 // pred_check_branch
      %20 = sbr.rel (0) target = $region21
    $region20: #{rn_forward.1} parent=1 // pred_region
      _
    $region21: #{rn_forward.1} parent=1 // pred_fallthru
      _
    %v21 = vld [vmem:[%s3] sm:$0x3f]
    %v22 = vld [vmem:[%s3] sm:$0x3]
    %v23 = vld [vmem:[%s3 + $0x6] sm:$0x1]
    %v24 = vld [vmem:[%s3 + $0x7] sm:$0x1]
    %v25 = vld [vmem:[%s2] sm:$0xff]
    %v26 = vld [vmem:[%s2 + $0x8] sm:$0xff]
    %v27 = vld [vmem:[%s2 + $0x10] sm:$0xff]
    %v28 = vld [vmem:[%s2 + $0x18] sm:$0xff]
    %v29 = vld [vmem:[%s0] sm:$0xff]
    %v30 = vld [vmem:[%s0 + $0x8] sm:$0xff]
    %v31 = vld [vmem:[%s0 + $0x10] sm:$0xff]
    %v32 = vld [vmem:[%s0 + $0x18] sm:$0xff]
    %v33 = vld [vmem:[%s0 + $0x20] sm:$0xf]
    %35 = vset.pattern.permute.xlu0 36
    %36 = vperm.xlu0 %35, %v21
    %v37 = vpop.permute.xlu0 %36
    %vm39 = vcmask 293888
    %v40 = vsel %vm39, %v21, 0
    %vm42 = vcmask 1043456
    %v44 = vsel %vm42, %v33, 0
    %46 = vmatpush.msra.mxu0 0.0
    %47 = vmatpush.msra.mxu0 0.0
    %48 = vmatpush.msra.mxu0 0.0
    %49 = vmatpush.msra.mxu0 0.0
    %50 = vmatpush.msra.mxu0 0.0
    %51 = vmatpush.msra.mxu0 0.0
    %52 = vmatpush.msra.mxu0 0.0
    %53 = vmatpush.msra.mxu0 0.0
    %54 = vmatpush.msra.mxu0 0.0
    %55 = vmatpush.msra.mxu0 0.0
    %56 = vmatpush.msra.mxu0 0.0
    %57 = vmatpush.msra.mxu0 %v44
    %58 = vmatpush.msra.mxu0 %v32
    %59 = vmatpush.msra.mxu0 %v31
    %60 = vmatpush.msra.mxu0 %v30
    %61 = vmatpush.msra.mxu0 %v29
    %62 = vmatmul.f32.gmra.mxu0 %v40
    %v63 = vpop.f32.mrf.mxu0
    %v64 = vadd.f32 %v37, %v63
    %65 = vdwg.mxu0
    %v66 = vmax.f32 %v64, 0.0
    %v68 = vrot.slane %v22, 2
    %69 = vrot.lane.b32.xlu0 %v68, 91
    %v70 = vpop.permute.xlu0 %69
    %vm72 = vcmask 1045504
    %v73 = vsel %vm72, %v66, %v70
    %vm74 = vcmask 64512
    %v76 = vsel %vm74, %v25, 0
    %v79 = vsel %vm74, %v26, 0
    %v82 = vsel %vm74, %v27, 0
    %v85 = vsel %vm74, %v28, 0
    %87 = vmatpush.msra.mxu0 0.0
    %88 = vmatpush.msra.mxu0 0.0
    %89 = vmatpush.msra.mxu0 0.0
    %90 = vmatpush.msra.mxu0 0.0
    %91 = vmatpush.msra.mxu0 0.0
    %92 = vmatpush.msra.mxu0 0.0
    %93 = vmatpush.msra.mxu0 0.0
    %94 = vmatpush.msra.mxu0 0.0
    %95 = vmatpush.msra.mxu0 0.0
    %96 = vmatpush.msra.mxu0 0.0
    %97 = vmatpush.msra.mxu0 0.0
    %98 = vmatpush.msra.mxu0 0.0
    %99 = vmatpush.msra.mxu0 0.0
    %100 = vmatpush.msra.mxu0 0.0
    %101 = vmatpush.msra.mxu0 0.0
    %102 = vmatpush.msra.mxu0 %v73
    %103 = vmatmul.f32.gmra.mxu0 %v76
    %v104 = vpop.f32.mrf.mxu0
    %v105 = vadd.f32 0.0, %v104
    %106 = vmatmul.f32.gmra.mxu0 %v79
    %v107 = vpop.f32.mrf.mxu0
    %v108 = vadd.f32 0.0, %v107
    %109 = vmatmul.f32.gmra.mxu0 %v82
    %v110 = vpop.f32.mrf.mxu0
    %v111 = vadd.f32 0.0, %v110
    %112 = vmatmul.f32.gmra.mxu0 %v85
    %v113 = vpop.f32.mrf.mxu0
    %v114 = vadd.f32 0.0, %v113
    %115 = vdwg.mxu0
    %116 = vrot.lane.b32.xlu0 %v25, 120
    %v117 = vpop.permute.xlu0 %116
    %118 = vrot.lane.b32.xlu0 %v26, 120
    %v119 = vpop.permute.xlu0 %118
    %120 = vrot.lane.b32.xlu0 %v27, 120
    %v121 = vpop.permute.xlu0 %120
    %122 = vrot.lane.b32.xlu0 %v28, 120
    %v123 = vpop.permute.xlu0 %122
    %v124 = vsel %vm74, %v117, 0
    %v126 = vsel %vm74, %v119, 0
    %v128 = vsel %vm74, %v121, 0
    %v130 = vsel %vm74, %v123, 0
    %132 = vmatpush.msra.mxu0 0.0
    %133 = vmatpush.msra.mxu0 0.0
    %134 = vmatpush.msra.mxu0 0.0
    %135 = vmatpush.msra.mxu0 0.0
    %136 = vmatpush.msra.mxu0 0.0
    %137 = vmatpush.msra.mxu0 0.0
    %138 = vmatpush.msra.mxu0 0.0
    %139 = vmatpush.msra.mxu0 0.0
    %140 = vmatpush.msra.mxu0 0.0
    %141 = vmatpush.msra.mxu0 0.0
    %142 = vmatpush.msra.mxu0 0.0
    %143 = vmatpush.msra.mxu0 0.0
    %144 = vmatpush.msra.mxu0 0.0
    %145 = vmatpush.msra.mxu0 0.0
    %146 = vmatpush.msra.mxu0 0.0
    %147 = vmatpush.msra.mxu0 %v73
    %148 = vmatmul.f32.gmra.mxu0 %v124
    %v149 = vpop.f32.mrf.mxu0
    %v150 = vadd.f32 0.0, %v149
    %151 = vmatmul.f32.gmra.mxu0 %v126
    %v152 = vpop.f32.mrf.mxu0
    %v153 = vadd.f32 0.0, %v152
    %154 = vmatmul.f32.gmra.mxu0 %v128
    %v155 = vpop.f32.mrf.mxu0
    %v156 = vadd.f32 0.0, %v155
    %157 = vmatmul.f32.gmra.mxu0 %v130
    %v158 = vpop.f32.mrf.mxu0
    %v159 = vadd.f32 0.0, %v158
    %160 = vdwg.mxu0
    %v161 = vld [vmem:[%s1] sm:$0xff]
    %v162 = vld [vmem:[%s1 + $0x8] sm:$0x7]
    %163 = vset.pattern.permute.xlu0 27
    %164 = vperm.xlu0 %163, %v25
    %v165 = vpop.permute.xlu0 %164
    %167 = vset.pattern.permute.xlu0 27
    %168 = vperm.xlu0 %167, %v26
    %v169 = vpop.permute.xlu0 %168
    %171 = vset.pattern.permute.xlu0 27
    %172 = vperm.xlu0 %171, %v27
    %v173 = vpop.permute.xlu0 %172
    %175 = vset.pattern.permute.xlu0 27
    %176 = vperm.xlu0 %175, %v28
    %v177 = vpop.permute.xlu0 %176
    %179 = vrot.lane.b32.xlu0 %v25, 112
    %v180 = vpop.permute.xlu0 %179
    %181 = vrot.lane.b32.xlu0 %v26, 112
    %v182 = vpop.permute.xlu0 %181
    %183 = vrot.lane.b32.xlu0 %v27, 112
    %v184 = vpop.permute.xlu0 %183
    %185 = vrot.lane.b32.xlu0 %v28, 112
    %v186 = vpop.permute.xlu0 %185
    %vm187 = vcmask 89088
    %v188 = vsel %vm187, %v180, 0
    %v190 = vsel %vm187, %v182, 0
    %v192 = vsel %vm187, %v184, 0
    %v194 = vsel %vm187, %v186, 0
    %vm196 = vcmask 1042432
    %v198 = vsel %vm196, %v162, 0
    %200 = vmatpush.msra.mxu0 0.0
    %201 = vmatpush.msra.mxu0 0.0
    %202 = vmatpush.msra.mxu0 0.0
    %203 = vmatpush.msra.mxu0 0.0
    %204 = vmatpush.msra.mxu0 0.0
    %205 = vmatpush.msra.mxu0 0.0
    %206 = vmatpush.msra.mxu0 0.0
    %207 = vmatpush.msra.mxu0 0.0
    %208 = vmatpush.msra.mxu0 0.0
    %209 = vmatpush.msra.mxu0 0.0
    %210 = vmatpush.msra.mxu0 0.0
    %211 = vmatpush.msra.mxu0 0.0
    %212 = vmatpush.msra.mxu0 0.0
    %213 = vmatpush.msra.mxu0 0.0
    %214 = vmatpush.msra.mxu0 %v198
    %215 = vmatpush.msra.mxu0 %v161
    %216 = vmatmul.f32.gmra.mxu0 %v188
    %v217 = vpop.f32.mrf.mxu0
    %v218 = vadd.f32 %v165, %v217
    %219 = vmatmul.f32.gmra.mxu0 %v190
    %v220 = vpop.f32.mrf.mxu0
    %v221 = vadd.f32 %v169, %v220
    %222 = vmatmul.f32.gmra.mxu0 %v192
    %v223 = vpop.f32.mrf.mxu0
    %v224 = vadd.f32 %v173, %v223
    %225 = vmatmul.f32.gmra.mxu0 %v194
    %v226 = vpop.f32.mrf.mxu0
    %v227 = vadd.f32 %v177, %v226
    %228 = vdwg.mxu0
    %233 = vrot.lane.b32.xlu0 %v150, 16
    %v234 = vpop.permute.xlu0 %233
    %235 = vrot.lane.b32.xlu0 %v153, 16
    %v236 = vpop.permute.xlu0 %235
    %237 = vrot.lane.b32.xlu0 %v156, 16
    %v238 = vpop.permute.xlu0 %237
    %239 = vrot.lane.b32.xlu0 %v159, 16
    %v240 = vpop.permute.xlu0 %239
    %vm245 = vcmask 130048
    %v246 = vsel %vm245, %v105, %v234
    %v247 = vsel %vm245, %v108, %v236
    %v248 = vsel %vm245, %v111, %v238
    %v249 = vsel %vm245, %v114, %v240
    %v250 = vld [vmem:[%s4] sm:$0xff]
    %v251 = vld [vmem:[%s4 + $0x8] sm:$0xff]
    %v252 = vld [vmem:[%s4 + $0x10] sm:$0xff]
    %v253 = vld [vmem:[%s4 + $0x18] sm:$0xff]
    %v254 = vld [vmem:[%s4 + $0x20] sm:$0xff]
    %v255 = vld [vmem:[%s4 + $0x28] sm:$0xff]
    %v256 = vld [vmem:[%s4 + $0x30] sm:$0xff]
    %v257 = vld [vmem:[%s4 + $0x38] sm:$0xff]
    %259 = vset.pattern.permute.xlu0 0
    %260 = vperm.xlu0 %259, %v218
    %v261 = vpop.permute.xlu0 %260
    %264 = vset.pattern.permute.xlu0 0
    %265 = vperm.xlu0 %264, %v221
    %v266 = vpop.permute.xlu0 %265
    %269 = vset.pattern.permute.xlu0 0
    %270 = vperm.xlu0 %269, %v224
    %v271 = vpop.permute.xlu0 %270
    %274 = vset.pattern.permute.xlu0 0
    %275 = vperm.xlu0 %274, %v227
    %v276 = vpop.permute.xlu0 %275
    %vm278 = vcmask 261120
    %v280 = vsel %vm278, %v246, 0
    %v283 = vsel %vm278, %v247, 0
    %v286 = vsel %vm278, %v248, 0
    %v289 = vsel %vm278, %v249, 0
    %291 = vmatpush.msra.mxu0 0.0
    %292 = vmatpush.msra.mxu0 0.0
    %293 = vmatpush.msra.mxu0 0.0
    %294 = vmatpush.msra.mxu0 0.0
    %295 = vmatpush.msra.mxu0 0.0
    %296 = vmatpush.msra.mxu0 0.0
    %297 = vmatpush.msra.mxu0 0.0
    %298 = vmatpush.msra.mxu0 0.0
    %299 = vmatpush.msra.mxu0 0.0
    %300 = vmatpush.msra.mxu0 0.0
    %301 = vmatpush.msra.mxu0 0.0
    %302 = vmatpush.msra.mxu0 0.0
    %303 = vmatpush.msra.mxu0 %v256
    %304 = vmatpush.msra.mxu0 %v254
    %305 = vmatpush.msra.mxu0 %v252
    %306 = vmatpush.msra.mxu0 %v250
    %307 = vmatmul.f32.gmra.mxu0 %v280
    %v308 = vpop.f32.mrf.mxu0
    %v309 = vadd.f32 %v261, %v308
    %310 = vmatmul.f32.gmra.mxu0 %v283
    %v311 = vpop.f32.mrf.mxu0
    %v312 = vadd.f32 %v266, %v311
    %313 = vmatmul.f32.gmra.mxu0 %v286
    %v314 = vpop.f32.mrf.mxu0
    %v315 = vadd.f32 %v271, %v314
    %316 = vmatmul.f32.gmra.mxu0 %v289
    %v317 = vpop.f32.mrf.mxu0
    %v318 = vadd.f32 %v276, %v317
    %319 = vdwg.mxu0
    %320 = vmatpush.msra.mxu0 0.0
    %321 = vmatpush.msra.mxu0 0.0
    %322 = vmatpush.msra.mxu0 0.0
    %323 = vmatpush.msra.mxu0 0.0
    %324 = vmatpush.msra.mxu0 0.0
    %325 = vmatpush.msra.mxu0 0.0
    %326 = vmatpush.msra.mxu0 0.0
    %327 = vmatpush.msra.mxu0 0.0
    %328 = vmatpush.msra.mxu0 0.0
    %329 = vmatpush.msra.mxu0 0.0
    %330 = vmatpush.msra.mxu0 0.0
    %331 = vmatpush.msra.mxu0 0.0
    %332 = vmatpush.msra.mxu0 %v257
    %333 = vmatpush.msra.mxu0 %v255
    %334 = vmatpush.msra.mxu0 %v253
    %335 = vmatpush.msra.mxu0 %v251
    %336 = vmatmul.f32.gmra.mxu0 %v280
    %v337 = vpop.f32.mrf.mxu0
    %v338 = vadd.f32 %v261, %v337
    %339 = vmatmul.f32.gmra.mxu0 %v283
    %v340 = vpop.f32.mrf.mxu0
    %v341 = vadd.f32 %v266, %v340
    %342 = vmatmul.f32.gmra.mxu0 %v286
    %v343 = vpop.f32.mrf.mxu0
    %v344 = vadd.f32 %v271, %v343
    %345 = vmatmul.f32.gmra.mxu0 %v289
    %v346 = vpop.f32.mrf.mxu0
    %v347 = vadd.f32 %v276, %v346
    %348 = vdwg.mxu0
    %v349 = vmax.f32 %v309, 0.0
    %v350 = vmax.f32 %v338, 0.0
    %v351 = vmax.f32 %v312, 0.0
    %v352 = vmax.f32 %v341, 0.0
    %v353 = vmax.f32 %v315, 0.0
    %v354 = vmax.f32 %v344, 0.0
    %v355 = vmax.f32 %v318, 0.0
    %v356 = vmax.f32 %v347, 0.0
    %357 = vset.pattern.permute.xlu0 60
    %358 = vperm.xlu0 %357, %v25
    %v359 = vpop.permute.xlu0 %358
    %361 = vset.pattern.permute.xlu0 60
    %362 = vperm.xlu0 %361, %v26
    %v363 = vpop.permute.xlu0 %362
    %365 = vset.pattern.permute.xlu0 60
    %366 = vperm.xlu0 %365, %v27
    %v367 = vpop.permute.xlu0 %366
    %369 = vset.pattern.permute.xlu0 60
    %370 = vperm.xlu0 %369, %v28
    %v371 = vpop.permute.xlu0 %370
    %373 = vrot.lane.b32.xlu0 %v25, 100
    %v374 = vpop.permute.xlu0 %373
    %375 = vrot.lane.b32.xlu0 %v26, 100
    %v376 = vpop.permute.xlu0 %375
    %377 = vrot.lane.b32.xlu0 %v27, 100
    %v378 = vpop.permute.xlu0 %377
    %379 = vrot.lane.b32.xlu0 %v28, 100
    %v380 = vpop.permute.xlu0 %379
    %v381 = vsel %vm278, %v374, 0
    %v383 = vsel %vm278, %v376, 0
    %v385 = vsel %vm278, %v378, 0
    %v387 = vsel %vm278, %v380, 0
    %389 = vmatpush.msra.mxu0 0.0
    %390 = vmatpush.msra.mxu0 0.0
    %391 = vmatpush.msra.mxu0 0.0
    %392 = vmatpush.msra.mxu0 0.0
    %393 = vmatpush.msra.mxu0 0.0
    %394 = vmatpush.msra.mxu0 0.0
    %395 = vmatpush.msra.mxu0 0.0
    %396 = vmatpush.msra.mxu0 0.0
    %397 = vmatpush.msra.mxu0 0.0
    %398 = vmatpush.msra.mxu0 0.0
    %399 = vmatpush.msra.mxu0 0.0
    %400 = vmatpush.msra.mxu0 0.0
    %401 = vmatpush.msra.mxu0 %v355
    %402 = vmatpush.msra.mxu0 %v353
    %403 = vmatpush.msra.mxu0 %v351
    %404 = vmatpush.msra.mxu0 %v349
    %405 = vmatmul.f32.gmra.mxu0 %v381
    %v406 = vpop.f32.mrf.mxu0
    %v407 = vadd.f32 %v359, %v406
    %408 = vmatmul.f32.gmra.mxu0 %v383
    %v409 = vpop.f32.mrf.mxu0
    %v410 = vadd.f32 %v363, %v409
    %411 = vmatmul.f32.gmra.mxu0 %v385
    %v412 = vpop.f32.mrf.mxu0
    %v413 = vadd.f32 %v367, %v412
    %414 = vmatmul.f32.gmra.mxu0 %v387
    %v415 = vpop.f32.mrf.mxu0
    %v416 = vadd.f32 %v371, %v415
    %417 = vdwg.mxu0
    %418 = vmatpush.msra.mxu0 0.0
    %419 = vmatpush.msra.mxu0 0.0
    %420 = vmatpush.msra.mxu0 0.0
    %421 = vmatpush.msra.mxu0 0.0
    %422 = vmatpush.msra.mxu0 0.0
    %423 = vmatpush.msra.mxu0 0.0
    %424 = vmatpush.msra.mxu0 0.0
    %425 = vmatpush.msra.mxu0 0.0
    %426 = vmatpush.msra.mxu0 0.0
    %427 = vmatpush.msra.mxu0 0.0
    %428 = vmatpush.msra.mxu0 0.0
    %429 = vmatpush.msra.mxu0 0.0
    %430 = vmatpush.msra.mxu0 %v356
    %431 = vmatpush.msra.mxu0 %v354
    %432 = vmatpush.msra.mxu0 %v352
    %433 = vmatpush.msra.mxu0 %v350
    %434 = vmatmul.f32.gmra.mxu0 %v381
    %v435 = vpop.f32.mrf.mxu0
    %v436 = vadd.f32 %v359, %v435
    %437 = vmatmul.f32.gmra.mxu0 %v383
    %v438 = vpop.f32.mrf.mxu0
    %v439 = vadd.f32 %v363, %v438
    %440 = vmatmul.f32.gmra.mxu0 %v385
    %v441 = vpop.f32.mrf.mxu0
    %v442 = vadd.f32 %v367, %v441
    %443 = vmatmul.f32.gmra.mxu0 %v387
    %v444 = vpop.f32.mrf.mxu0
    %v445 = vadd.f32 %v371, %v444
    %446 = vdwg.mxu0
    %v447 = vmax.f32 %v407, 0.0
    %v448 = vmax.f32 %v436, 0.0
    %v449 = vmax.f32 %v410, 0.0
    %v450 = vmax.f32 %v439, 0.0
    %v451 = vmax.f32 %v413, 0.0
    %v452 = vmax.f32 %v442, 0.0
    %v453 = vmax.f32 %v416, 0.0
    %v454 = vmax.f32 %v445, 0.0
    %v455 = vadd.f32 %v447, %v448
    %456 = vadd.xlane.f32.xlu0 %v455
    %v457 = vpop.xlane.xlu0 %456
    %v458 = vadd.f32 %v449, %v450
    %459 = vadd.xlane.f32.xlu0 %v458
    %v460 = vpop.xlane.xlu0 %459
    %v461 = vadd.f32 %v451, %v452
    %462 = vadd.xlane.f32.xlu0 %v461
    %v463 = vpop.xlane.xlu0 %462
    %v464 = vadd.f32 %v453, %v454
    %465 = vadd.xlane.f32.xlu0 %v464
    %v466 = vpop.xlane.xlu0 %465
    %471 = vrot.lane.b32.xlu0 %v105, 112
    %v472 = vpop.permute.xlu0 %471
    %473 = vrot.lane.b32.xlu0 %v108, 112
    %v474 = vpop.permute.xlu0 %473
    %475 = vrot.lane.b32.xlu0 %v111, 112
    %v476 = vpop.permute.xlu0 %475
    %477 = vrot.lane.b32.xlu0 %v114, 112
    %v478 = vpop.permute.xlu0 %477
    %v483 = vsel %vm245, %v472, %v150
    %v484 = vsel %vm245, %v474, %v153
    %v485 = vsel %vm245, %v476, %v156
    %v486 = vsel %vm245, %v478, %v159
    %487 = vset.pattern.permute.xlu0 1
    %488 = vperm.xlu0 %487, %v218
    %v489 = vpop.permute.xlu0 %488
    %491 = vset.pattern.permute.xlu0 1
    %492 = vperm.xlu0 %491, %v221
    %v493 = vpop.permute.xlu0 %492
    %495 = vset.pattern.permute.xlu0 1
    %496 = vperm.xlu0 %495, %v224
    %v497 = vpop.permute.xlu0 %496
    %499 = vset.pattern.permute.xlu0 1
    %500 = vperm.xlu0 %499, %v227
    %v501 = vpop.permute.xlu0 %500
    %v504 = vsel %vm278, %v483, 0
    %v507 = vsel %vm278, %v484, 0
    %v510 = vsel %vm278, %v485, 0
    %v513 = vsel %vm278, %v486, 0
    %515 = vmatpush.msra.mxu0 0.0
    %516 = vmatpush.msra.mxu0 0.0
    %517 = vmatpush.msra.mxu0 0.0
    %518 = vmatpush.msra.mxu0 0.0
    %519 = vmatpush.msra.mxu0 0.0
    %520 = vmatpush.msra.mxu0 0.0
    %521 = vmatpush.msra.mxu0 0.0
    %522 = vmatpush.msra.mxu0 0.0
    %523 = vmatpush.msra.mxu0 0.0
    %524 = vmatpush.msra.mxu0 0.0
    %525 = vmatpush.msra.mxu0 0.0
    %526 = vmatpush.msra.mxu0 0.0
    %527 = vmatpush.msra.mxu0 %v256
    %528 = vmatpush.msra.mxu0 %v254
    %529 = vmatpush.msra.mxu0 %v252
    %530 = vmatpush.msra.mxu0 %v250
    %531 = vmatmul.f32.gmra.mxu0 %v504
    %v532 = vpop.f32.mrf.mxu0
    %v533 = vadd.f32 %v489, %v532
    %534 = vmatmul.f32.gmra.mxu0 %v507
    %v535 = vpop.f32.mrf.mxu0
    %v536 = vadd.f32 %v493, %v535
    %537 = vmatmul.f32.gmra.mxu0 %v510
    %v538 = vpop.f32.mrf.mxu0
    %v539 = vadd.f32 %v497, %v538
    %540 = vmatmul.f32.gmra.mxu0 %v513
    %v541 = vpop.f32.mrf.mxu0
    %v542 = vadd.f32 %v501, %v541
    %543 = vdwg.mxu0
    %544 = vmatpush.msra.mxu0 0.0
    %545 = vmatpush.msra.mxu0 0.0
    %546 = vmatpush.msra.mxu0 0.0
    %547 = vmatpush.msra.mxu0 0.0
    %548 = vmatpush.msra.mxu0 0.0
    %549 = vmatpush.msra.mxu0 0.0
    %550 = vmatpush.msra.mxu0 0.0
    %551 = vmatpush.msra.mxu0 0.0
    %552 = vmatpush.msra.mxu0 0.0
    %553 = vmatpush.msra.mxu0 0.0
    %554 = vmatpush.msra.mxu0 0.0
    %555 = vmatpush.msra.mxu0 0.0
    %556 = vmatpush.msra.mxu0 %v257
    %557 = vmatpush.msra.mxu0 %v255
    %558 = vmatpush.msra.mxu0 %v253
    %559 = vmatpush.msra.mxu0 %v251
    %560 = vmatmul.f32.gmra.mxu0 %v504
    %v561 = vpop.f32.mrf.mxu0
    %v562 = vadd.f32 %v489, %v561
    %563 = vmatmul.f32.gmra.mxu0 %v507
    %v564 = vpop.f32.mrf.mxu0
    %v565 = vadd.f32 %v493, %v564
    %566 = vmatmul.f32.gmra.mxu0 %v510
    %v567 = vpop.f32.mrf.mxu0
    %v568 = vadd.f32 %v497, %v567
    %569 = vmatmul.f32.gmra.mxu0 %v513
    %v570 = vpop.f32.mrf.mxu0
    %v571 = vadd.f32 %v501, %v570
    %572 = vdwg.mxu0
    %v573 = vmax.f32 %v533, 0.0
    %v574 = vmax.f32 %v562, 0.0
    %v575 = vmax.f32 %v536, 0.0
    %v576 = vmax.f32 %v565, 0.0
    %v577 = vmax.f32 %v539, 0.0
    %v578 = vmax.f32 %v568, 0.0
    %v579 = vmax.f32 %v542, 0.0
    %v580 = vmax.f32 %v571, 0.0
    %581 = vmatpush.msra.mxu0 0.0
    %582 = vmatpush.msra.mxu0 0.0
    %583 = vmatpush.msra.mxu0 0.0
    %584 = vmatpush.msra.mxu0 0.0
    %585 = vmatpush.msra.mxu0 0.0
    %586 = vmatpush.msra.mxu0 0.0
    %587 = vmatpush.msra.mxu0 0.0
    %588 = vmatpush.msra.mxu0 0.0
    %589 = vmatpush.msra.mxu0 0.0
    %590 = vmatpush.msra.mxu0 0.0
    %591 = vmatpush.msra.mxu0 0.0
    %592 = vmatpush.msra.mxu0 0.0
    %593 = vmatpush.msra.mxu0 %v579
    %594 = vmatpush.msra.mxu0 %v577
    %595 = vmatpush.msra.mxu0 %v575
    %596 = vmatpush.msra.mxu0 %v573
    %597 = vmatmul.f32.gmra.mxu0 %v381
    %v598 = vpop.f32.mrf.mxu0
    %v599 = vadd.f32 %v359, %v598
    %600 = vmatmul.f32.gmra.mxu0 %v383
    %v601 = vpop.f32.mrf.mxu0
    %v602 = vadd.f32 %v363, %v601
    %603 = vmatmul.f32.gmra.mxu0 %v385
    %v604 = vpop.f32.mrf.mxu0
    %v605 = vadd.f32 %v367, %v604
    %606 = vmatmul.f32.gmra.mxu0 %v387
    %v607 = vpop.f32.mrf.mxu0
    %v608 = vadd.f32 %v371, %v607
    %609 = vdwg.mxu0
    %610 = vmatpush.msra.mxu0 0.0
    %611 = vmatpush.msra.mxu0 0.0
    %612 = vmatpush.msra.mxu0 0.0
    %613 = vmatpush.msra.mxu0 0.0
    %614 = vmatpush.msra.mxu0 0.0
    %615 = vmatpush.msra.mxu0 0.0
    %616 = vmatpush.msra.mxu0 0.0
    %617 = vmatpush.msra.mxu0 0.0
    %618 = vmatpush.msra.mxu0 0.0
    %619 = vmatpush.msra.mxu0 0.0
    %620 = vmatpush.msra.mxu0 0.0
    %621 = vmatpush.msra.mxu0 0.0
    %622 = vmatpush.msra.mxu0 %v580
    %623 = vmatpush.msra.mxu0 %v578
    %624 = vmatpush.msra.mxu0 %v576
    %625 = vmatpush.msra.mxu0 %v574
    %626 = vmatmul.f32.gmra.mxu0 %v381
    %v627 = vpop.f32.mrf.mxu0
    %v628 = vadd.f32 %v359, %v627
    %629 = vmatmul.f32.gmra.mxu0 %v383
    %v630 = vpop.f32.mrf.mxu0
    %v631 = vadd.f32 %v363, %v630
    %632 = vmatmul.f32.gmra.mxu0 %v385
    %v633 = vpop.f32.mrf.mxu0
    %v634 = vadd.f32 %v367, %v633
    %635 = vmatmul.f32.gmra.mxu0 %v387
    %v636 = vpop.f32.mrf.mxu0
    %v637 = vadd.f32 %v371, %v636
    %638 = vdwg.mxu0
    %v639 = vmax.f32 %v599, 0.0
    %v640 = vmax.f32 %v628, 0.0
    %v641 = vmax.f32 %v602, 0.0
    %v642 = vmax.f32 %v631, 0.0
    %v643 = vmax.f32 %v605, 0.0
    %v644 = vmax.f32 %v634, 0.0
    %v645 = vmax.f32 %v608, 0.0
    %v646 = vmax.f32 %v637, 0.0
    %v647 = vadd.f32 %v639, %v640
    %648 = vadd.xlane.f32.xlu0 %v647
    %v649 = vpop.xlane.xlu0 %648
    %v650 = vadd.f32 %v641, %v642
    %651 = vadd.xlane.f32.xlu0 %v650
    %v652 = vpop.xlane.xlu0 %651
    %v653 = vadd.f32 %v643, %v644
    %654 = vadd.xlane.f32.xlu0 %v653
    %v655 = vpop.xlane.xlu0 %654
    %v656 = vadd.f32 %v645, %v646
    %657 = vadd.xlane.f32.xlu0 %v656
    %v658 = vpop.xlane.xlu0 %657
    %vm659 = vcmask 7168
    %v660 = vsel %vm659, %v457, %v649
    %v661 = vsel %vm659, %v460, %v652
    %v662 = vsel %vm659, %v463, %v655
    %v663 = vsel %vm659, %v466, %v658
    %vm664 = vcmask 15360
    %v665 = vsel %vm664, %v660, 0.0
    %v666 = vsel %vm664, %v661, 0.0
    %v667 = vsel %vm664, %v662, 0.0
    %v668 = vsel %vm664, %v663, 0.0
    %669 = vxpose.xlu0.b32.start [1/16] %v665, 128
    %670 = vxpose.xlu0.b32.cont [2/16] %v666, 128
    %671 = vxpose.xlu0.b32.cont [3/16] %v667, 128
    %672 = vxpose.xlu0.b32.cont [4/16] %v668, 128
    %673 = vxpose.xlu0.b32.cont [5/16] 0.0, 128
    %674 = vxpose.xlu0.b32.cont [6/16] 0.0, 128
    %675 = vxpose.xlu0.b32.cont [7/16] 0.0, 128
    %676 = vxpose.xlu0.b32.cont [8/16] 0.0, 128
    %677 = vxpose.xlu0.b32.cont [9/16] 0.0, 128
    %678 = vxpose.xlu0.b32.cont [10/16] 0.0, 128
    %679 = vxpose.xlu0.b32.cont [11/16] 0.0, 128
    %680 = vxpose.xlu0.b32.cont [12/16] 0.0, 128
    %681 = vxpose.xlu0.b32.cont [13/16] 0.0, 128
    %682 = vxpose.xlu0.b32.cont [14/16] 0.0, 128
    %683 = vxpose.xlu0.b32.cont [15/16] 0.0, 128
    %684 = vxpose.xlu0.b32.end [16/16] 0.0, 128
    %v685 = vpop.trf.xlu0
    %v686 = vpop.trf.xlu0
    %v687 = vpop.trf.xlu0
    %v688 = vpop.trf.xlu0
    %v689 = vpop.trf.xlu0
    %v690 = vpop.trf.xlu0
    %v691 = vpop.trf.xlu0
    %v692 = vpop.trf.xlu0
    %v693 = vpop.trf.xlu0
    %v694 = vpop.trf.xlu0
    %v695 = vpop.trf.xlu0
    %v696 = vpop.trf.xlu0
    %v697 = vpop.trf.xlu0
    %v698 = vpop.trf.xlu0
    %v699 = vpop.trf.xlu0
    %v700 = vpop.trf.xlu0
    %v701 = vperm.slane %v23, 0
    %702 = vrot.lane.b32.xlu0 %v25, 67
    %v703 = vpop.permute.xlu0 %702
    %704 = vrot.lane.b32.xlu0 %v26, 67
    %v705 = vpop.permute.xlu0 %704
    %706 = vrot.lane.b32.xlu0 %v27, 67
    %v707 = vpop.permute.xlu0 %706
    %708 = vrot.lane.b32.xlu0 %v28, 67
    %v709 = vpop.permute.xlu0 %708
    %v715 = vsel %vm278, %v685, 0
    %717 = vmatpush.msra.mxu0 0.0
    %718 = vmatpush.msra.mxu0 0.0
    %719 = vmatpush.msra.mxu0 0.0
    %720 = vmatpush.msra.mxu0 0.0
    %721 = vmatpush.msra.mxu0 0.0
    %722 = vmatpush.msra.mxu0 0.0
    %723 = vmatpush.msra.mxu0 0.0
    %724 = vmatpush.msra.mxu0 0.0
    %725 = vmatpush.msra.mxu0 0.0
    %726 = vmatpush.msra.mxu0 0.0
    %727 = vmatpush.msra.mxu0 0.0
    %728 = vmatpush.msra.mxu0 0.0
    %729 = vmatpush.msra.mxu0 %v709
    %730 = vmatpush.msra.mxu0 %v707
    %731 = vmatpush.msra.mxu0 %v705
    %732 = vmatpush.msra.mxu0 %v703
    %733 = vmatmul.f32.gmra.mxu0 %v715
    %v734 = vpop.f32.mrf.mxu0
    %v735 = vadd.f32 %v701, %v734
    %736 = vdwg.mxu0
    %v737 = vmax.f32 %v735, 0.0
    %v738 = vperm.slane %v24, 0
    %739 = vrot.lane.b32.xlu0 %v25, 35
    %v740 = vpop.permute.xlu0 %739
    %741 = vrot.lane.b32.xlu0 %v26, 35
    %v742 = vpop.permute.xlu0 %741
    %743 = vrot.lane.b32.xlu0 %v27, 35
    %v744 = vpop.permute.xlu0 %743
    %745 = vrot.lane.b32.xlu0 %v28, 35
    %v746 = vpop.permute.xlu0 %745
    %v752 = vsel %vm278, %v737, 0
    %754 = vmatpush.msra.mxu0 0.0
    %755 = vmatpush.msra.mxu0 0.0
    %756 = vmatpush.msra.mxu0 0.0
    %757 = vmatpush.msra.mxu0 0.0
    %758 = vmatpush.msra.mxu0 0.0
    %759 = vmatpush.msra.mxu0 0.0
    %760 = vmatpush.msra.mxu0 0.0
    %761 = vmatpush.msra.mxu0 0.0
    %762 = vmatpush.msra.mxu0 0.0
    %763 = vmatpush.msra.mxu0 0.0
    %764 = vmatpush.msra.mxu0 0.0
    %765 = vmatpush.msra.mxu0 0.0
    %766 = vmatpush.msra.mxu0 %v746
    %767 = vmatpush.msra.mxu0 %v744
    %768 = vmatpush.msra.mxu0 %v742
    %769 = vmatpush.msra.mxu0 %v740
    %770 = vmatmul.f32.gmra.mxu0 %v752
    %v771 = vpop.f32.mrf.mxu0
    %v772 = vadd.f32 %v738, %v771
    %773 = vdwg.mxu0
    %vm774 = vcmask 74752
    %775 = vst.msk [vmem:[#allocation2] sm:$0x3] %vm774, %v772
    // Predicated region
    $region22: #{rn_forward.1} parent=1 // pred_check
      _
    $region23: #{rn_forward.1} parent=1 // pred_check_branch
      %777 = sbr.rel (0) target = $region25
    $region24: #{rn_forward.1} parent=1 // pred_region
      %779 = vsyncadd [#allocation3], 0
      %s781 = sshll.u32 [#allocation2], 4
      %s782 = int_to_ptr.vmem [resolvable:$true] %s781
      %s783 = sshll.u32 %s5, 4
      %s784 = int_to_ptr.hbm [resolvable:$true] %s783
      %786 = dma.vmem_to_hbm [thread:$0]  %s782, 32, %s784, [#allocation3]
    $region25: #{rn_forward.1} parent=1 // pred_fallthru
      _
    // Predicated region
    $region26: #{rn_forward.1} parent=1 // pred_check
      _
    $region27: #{rn_forward.1} parent=1 // pred_check_branch
      %788 = sbr.rel (0) target = $region29
    $region28: #{rn_forward.1} parent=1 // pred_region
      %790 = dma.done [#allocation3], 32
    $region29: #{rn_forward.1} parent=1 // pred_fallthru
      _
    %791 = vsyncpa [#allocation3], 1

</llo_original>
